<compile_context>
chip_gen: v5e
topology: v5e:2x2
jax: 0.10.0
libtpu: 0.0.40
codegen_flags: <defaults>
</compile_context>

<pallas_src>
import functools

import jax
import jax.numpy as jnp
from jax.experimental import pallas as pl
from jax.experimental.pallas import tpu as pltpu


# ------------------------------ Fused Pallas kernel ------------------------------

def _fused_kernel(x_ref, p_ref, o_ref, *, n_batch, c_in, c_out, hp, wp, k_out,
                  min_value, max_value):
    # x_ref: (N, Cin, H, W)         raw NCHW input (full array in VMEM)
    # p_ref: (8, 128)               packed parameters (see pack_params)
    # o_ref: (N*Cout*Hp, K)         output slab, rows in (n, d, h) row-major order
    rows = n_batch * hp
    cw = c_out * wp

    # ---- parameter rows: loaded once, reused for every (n, d, w) ----
    bct_t = p_ref[0:1, 0:cw]                                              # conv bias tiled over w, (1, Cout*Wp)
    wct_rows = [p_ref[1 + c:2 + c, 0:c_out] for c in range(c_in)]         # (1, Cout) each
    bl_row = p_ref[1 + c_in:2 + c_in, 0:k_out]                            # (1, K)
    wl_rows = [p_ref[2 + c_in + w:3 + c_in + w, 0:k_out] for w in range(wp)]  # (1, K) each

    # ---- crop (ConvTranspose2d padding=1): each plane read exactly once, batched over n ----
    xcs = []
    for c in range(c_in):
        parts = [x_ref[n, c, 1:1 + hp, 1:1 + wp] for n in range(n_batch)]
        xcs.append(parts[0] if n_batch == 1 else jnp.concatenate(parts, axis=0))  # (rows, Wp)

    # ---- ConvTranspose2d(k=1, s=1): pointwise channel mix, Cin*Wp wide VPU MACs ----
    a_cols = []
    for w in range(wp):
        acc = xcs[0][:, w:w + 1] * wct_rows[0]                            # (rows, Cout)
        for c in range(1, c_in):
            acc = acc + xcs[c][:, w:w + 1] * wct_rows[c]
        a_cols.append(acc)
    # lane index j = w*Cout + d
    a = jnp.concatenate(a_cols, axis=1) + bct_t                           # (rows, Cout*Wp)

    # ---- clamp_min / clamp_max / sigmoid: ONE pass over the whole activation ----
    s = jax.nn.sigmoid(jnp.clip(a, min_value, max_value))                 # (rows, Cout*Wp)

    # ---- Linear(Wp, K) along the cropped width + store in final (n, d, h, k) order ----
    for d in range(c_out):
        blk = bl_row                                                      # (1, K) -> broadcasts up
        for w in range(wp):
            blk = blk + s[:, w * c_out + d:w * c_out + d + 1] * wl_rows[w]
        blk = blk.astype(o_ref.dtype)                                     # (rows, K)
        for n in range(n_batch):
            r0 = (n * c_out + d) * hp                                     # aligned (multiple of Hp=8)
            o_ref[r0:r0 + hp, :] = blk[n * hp:(n + 1) * hp, :]


# ------------------------------ One-time parameter prep ------------------------------

def pack_params(wct, bct, wl, bl):
    """Pack all weights/biases (already transposed / tiled exactly as the kernel consumes
    them) into a single (8, 128) f32 slab -> one HBM->VMEM DMA instead of four."""
    c_in, c_out = wct.shape          # ConvTranspose2d weight[:, :, 0, 0]: (Cin, Cout)
    k_out, wp = wl.shape             # Linear weight: (out_features, in_features)
    n_rows = 2 + c_in + wp
    assert n_rows <= 8 and max(c_out * wp, k_out) <= 128
    p = jnp.zeros((8, 128), jnp.float32)
    p = p.at[0, :c_out * wp].set(jnp.tile(bct.astype(jnp.float32), wp))   # conv bias tiled over w
    p = p.at[1:1 + c_in, :c_out].set(wct.astype(jnp.float32))             # conv weight rows
    p = p.at[1 + c_in, :k_out].set(bl.astype(jnp.float32))                # linear bias
    p = p.at[2 + c_in:2 + c_in + wp, :k_out].set(wl.T.astype(jnp.float32))  # linear weight, (Wp, K)
    return p


# ---------------------------------- Forward pass ----------------------------------

def make_model_forward(wct, bct, wl, bl, min_value=0.5, max_value=10.9):
    """Returns forward(x); parameters are packed once here (init), not per call."""
    c_in, c_out = wct.shape
    k_out, wp_lin = wl.shape
    params = pack_params(wct, bct, wl, bl)

    def forward(x):
        n, c, h, w = x.shape
        assert c == c_in, "input channel count mismatch"
        hp, wp = h - 2, w - 2
        assert hp >= 1 and wp >= 1, "ConvTranspose2d(k=1,s=1,p=1) needs H, W > 2"
        # Fail loudly (like PyTorch would) if the cropped width != Linear in_features.
        assert wp == wp_lin, (
            f"post-conv width {wp} != Linear in_features {wp_lin}; "
            f"input width must be {wp_lin + 2}")

        kernel = functools.partial(
            _fused_kernel, n_batch=n, c_in=c_in, c_out=c_out, hp=hp, wp=wp,
            k_out=k_out, min_value=min_value, max_value=max_value)

        flops = n * c_out * hp * wp * 2 * c_in + n * c_out * hp * k_out * 2 * wp
        cost = pl.CostEstimate(
            flops=flops,
            transcendentals=n * c_out * hp * wp,
            bytes_accessed=(x.size + params.size + n * c_out * hp * k_out) * 4)

        out2d = pl.pallas_call(
            kernel,
            out_shape=jax.ShapeDtypeStruct((n * c_out * hp, k_out), jnp.float32),
            in_specs=[pl.BlockSpec(memory_space=pltpu.MemorySpace.VMEM),
                      pl.BlockSpec(memory_space=pltpu.MemorySpace.VMEM)],
            out_specs=pl.BlockSpec(memory_space=pltpu.MemorySpace.VMEM),
            cost_estimate=cost,
        )(x, params)

        # v6 = v5.view(v5.size() + (1, 1)) — slab is already in (n, d, h, k) row-major
        # order, so this reshape is metadata-only.
        return out2d.reshape(n, c_out, hp, k_out, 1, 1)

    return jax.jit(forward)


# ------------------------------- Reference (pure JAX) -------------------------------

def model_forward_ref(x, wct, bct, wl, bl, min_value=0.5, max_value=10.9):
    n, c, h, w = x.shape
    xc = x[:, :, 1:h - 1, 1:w - 1]                              # crop (padding=1, k=1, s=1)
    v1 = jnp.einsum("nchw,cd->ndhw", xc, wct) + bct[None, :, None, None]
    v4 = jax.nn.sigmoid(jnp.clip(v1, min_value, max_value))
    v5 = jnp.einsum("ndhw,kw->ndhk", v4, wl) + bl
    return v5[..., None, None]


# --------------------------------------- Main ---------------------------------------

if __name__ == "__main__":
    key = jax.random.PRNGKey(0)
    k_x, k_wct, k_bct, k_wl, k_bl = jax.random.split(key, 5)

    # Width must be 4 so the post-conv width is 2 == Linear in_features.
    N, Cin, H, W = 2, 3, 10, 4
    x = jax.random.normal(k_x, (N, Cin, H, W), dtype=jnp.float32)

    # Parameter shapes from the module's __init__.
    wct = jax.random.normal(k_wct, (3, 4), dtype=jnp.float32) * 0.5   # ConvT weight[:, :, 0, 0]
    bct = jax.random.normal(k_bct, (4,), dtype=jnp.float32) * 0.1     # ConvT bias
    wl = jax.random.normal(k_wl, (28, 2), dtype=jnp.float32) * 0.5    # Linear weight (out, in)
    bl = jax.random.normal(k_bl, (28,), dtype=jnp.float32) * 0.1      # Linear bias

    forward = make_model_forward(wct, bct, wl, bl)
    out = forward(x)
    out = jax.block_until_ready(out)

    ref = model_forward_ref(x, wct, bct, wl, bl)
    assert out.shape == (N, 4, H - 2, 28, 1, 1), out.shape
    assert jnp.allclose(out, ref, atol=1e-5, rtol=1e-5), "mismatch vs reference"

    print("KERNEL_OK")
</pallas_src>

<mosaic_0001>
module attributes {stable_mosaic.version = 11 : i64} {
  func.func @_fused_kernel(%arg0: memref<2x3x10x4xf32, #tpu.memory_space<vmem>>, %arg1: memref<8x128xf32, #tpu.memory_space<vmem>>, %arg2: memref<64x28xf32, #tpu.memory_space<vmem>>) attributes {dimension_semantics = [], scalar_prefetch = 0 : i64, scratch_operands = 0 : i64, tpu.core_type = #tpu.core_type<tc>} {
    %c0 = arith.constant 0 : index
    %c0_0 = arith.constant 0 : index
    %0 = vector.load %arg1[%c0, %c0_0] : memref<8x128xf32, #tpu.memory_space<vmem>>, vector<1x8xf32>
    %c1 = arith.constant 1 : index
    %c0_1 = arith.constant 0 : index
    %1 = vector.load %arg1[%c1, %c0_1] : memref<8x128xf32, #tpu.memory_space<vmem>>, vector<1x4xf32>
    %c2 = arith.constant 2 : index
    %c0_2 = arith.constant 0 : index
    %2 = vector.load %arg1[%c2, %c0_2] : memref<8x128xf32, #tpu.memory_space<vmem>>, vector<1x4xf32>
    %c3 = arith.constant 3 : index
    %c0_3 = arith.constant 0 : index
    %3 = vector.load %arg1[%c3, %c0_3] : memref<8x128xf32, #tpu.memory_space<vmem>>, vector<1x4xf32>
    %c4 = arith.constant 4 : index
    %c0_4 = arith.constant 0 : index
    %4 = vector.load %arg1[%c4, %c0_4] : memref<8x128xf32, #tpu.memory_space<vmem>>, vector<1x28xf32>
    %c5 = arith.constant 5 : index
    %c0_5 = arith.constant 0 : index
    %5 = vector.load %arg1[%c5, %c0_5] : memref<8x128xf32, #tpu.memory_space<vmem>>, vector<1x28xf32>
    %c6 = arith.constant 6 : index
    %c0_6 = arith.constant 0 : index
    %6 = vector.load %arg1[%c6, %c0_6] : memref<8x128xf32, #tpu.memory_space<vmem>>, vector<1x28xf32>
    %c0_7 = arith.constant 0 : index
    %c0_8 = arith.constant 0 : index
    %c1_9 = arith.constant 1 : index
    %c1_10 = arith.constant 1 : index
    %7 = vector.load %arg0[%c0_7, %c0_8, %c1_9, %c1_10] : memref<2x3x10x4xf32, #tpu.memory_space<vmem>>, vector<1x1x8x2xf32>
    %8 = vector.shape_cast %7 : vector<1x1x8x2xf32> to vector<8x2xf32>
    %c1_11 = arith.constant 1 : index
    %c0_12 = arith.constant 0 : index
    %c1_13 = arith.constant 1 : index
    %c1_14 = arith.constant 1 : index
    %9 = vector.load %arg0[%c1_11, %c0_12, %c1_13, %c1_14] : memref<2x3x10x4xf32, #tpu.memory_space<vmem>>, vector<1x1x8x2xf32>
    %10 = vector.shape_cast %9 : vector<1x1x8x2xf32> to vector<8x2xf32>
    %11 = tpu.concatenate %8, %10 in 0 : vector<8x2xf32>, vector<8x2xf32> -> vector<16x2xf32>
    %c0_15 = arith.constant 0 : index
    %c1_16 = arith.constant 1 : index
    %c1_17 = arith.constant 1 : index
    %c1_18 = arith.constant 1 : index
    %12 = vector.load %arg0[%c0_15, %c1_16, %c1_17, %c1_18] : memref<2x3x10x4xf32, #tpu.memory_space<vmem>>, vector<1x1x8x2xf32>
    %13 = vector.shape_cast %12 : vector<1x1x8x2xf32> to vector<8x2xf32>
    %c1_19 = arith.constant 1 : index
    %c1_20 = arith.constant 1 : index
    %c1_21 = arith.constant 1 : index
    %c1_22 = arith.constant 1 : index
    %14 = vector.load %arg0[%c1_19, %c1_20, %c1_21, %c1_22] : memref<2x3x10x4xf32, #tpu.memory_space<vmem>>, vector<1x1x8x2xf32>
    %15 = vector.shape_cast %14 : vector<1x1x8x2xf32> to vector<8x2xf32>
    %16 = tpu.concatenate %13, %15 in 0 : vector<8x2xf32>, vector<8x2xf32> -> vector<16x2xf32>
    %c0_23 = arith.constant 0 : index
    %c2_24 = arith.constant 2 : index
    %c1_25 = arith.constant 1 : index
    %c1_26 = arith.constant 1 : index
    %17 = vector.load %arg0[%c0_23, %c2_24, %c1_25, %c1_26] : memref<2x3x10x4xf32, #tpu.memory_space<vmem>>, vector<1x1x8x2xf32>
    %18 = vector.shape_cast %17 : vector<1x1x8x2xf32> to vector<8x2xf32>
    %c1_27 = arith.constant 1 : index
    %c2_28 = arith.constant 2 : index
    %c1_29 = arith.constant 1 : index
    %c1_30 = arith.constant 1 : index
    %19 = vector.load %arg0[%c1_27, %c2_28, %c1_29, %c1_30] : memref<2x3x10x4xf32, #tpu.memory_space<vmem>>, vector<1x1x8x2xf32>
    %20 = vector.shape_cast %19 : vector<1x1x8x2xf32> to vector<8x2xf32>
    %21 = tpu.concatenate %18, %20 in 0 : vector<8x2xf32>, vector<8x2xf32> -> vector<16x2xf32>
    %22 = vector.extract_strided_slice %11 {offsets = [0, 0], sizes = [16, 1], strides = [1, 1]} : vector<16x2xf32> to vector<16x1xf32>
    %23 = vector.broadcast %22 : vector<16x1xf32> to vector<16x4xf32>
    %24 = vector.broadcast %1 : vector<1x4xf32> to vector<16x4xf32>
    %25 = arith.mulf %23, %24 : vector<16x4xf32>
    %26 = vector.extract_strided_slice %16 {offsets = [0, 0], sizes = [16, 1], strides = [1, 1]} : vector<16x2xf32> to vector<16x1xf32>
    %27 = vector.broadcast %26 : vector<16x1xf32> to vector<16x4xf32>
    %28 = vector.broadcast %2 : vector<1x4xf32> to vector<16x4xf32>
    %29 = arith.mulf %27, %28 : vector<16x4xf32>
    %30 = arith.addf %25, %29 : vector<16x4xf32>
    %31 = vector.extract_strided_slice %21 {offsets = [0, 0], sizes = [16, 1], strides = [1, 1]} : vector<16x2xf32> to vector<16x1xf32>
    %32 = vector.broadcast %31 : vector<16x1xf32> to vector<16x4xf32>
    %33 = vector.broadcast %3 : vector<1x4xf32> to vector<16x4xf32>
    %34 = arith.mulf %32, %33 : vector<16x4xf32>
    %35 = arith.addf %30, %34 : vector<16x4xf32>
    %36 = vector.extract_strided_slice %11 {offsets = [0, 1], sizes = [16, 1], strides = [1, 1]} : vector<16x2xf32> to vector<16x1xf32>
    %37 = vector.broadcast %36 : vector<16x1xf32> to vector<16x4xf32>
    %38 = vector.broadcast %1 : vector<1x4xf32> to vector<16x4xf32>
    %39 = arith.mulf %37, %38 : vector<16x4xf32>
    %40 = vector.extract_strided_slice %16 {offsets = [0, 1], sizes = [16, 1], strides = [1, 1]} : vector<16x2xf32> to vector<16x1xf32>
    %41 = vector.broadcast %40 : vector<16x1xf32> to vector<16x4xf32>
    %42 = vector.broadcast %2 : vector<1x4xf32> to vector<16x4xf32>
    %43 = arith.mulf %41, %42 : vector<16x4xf32>
    %44 = arith.addf %39, %43 : vector<16x4xf32>
    %45 = vector.extract_strided_slice %21 {offsets = [0, 1], sizes = [16, 1], strides = [1, 1]} : vector<16x2xf32> to vector<16x1xf32>
    %46 = vector.broadcast %45 : vector<16x1xf32> to vector<16x4xf32>
    %47 = vector.broadcast %3 : vector<1x4xf32> to vector<16x4xf32>
    %48 = arith.mulf %46, %47 : vector<16x4xf32>
    %49 = arith.addf %44, %48 : vector<16x4xf32>
    %50 = tpu.concatenate %35, %49 in 1 : vector<16x4xf32>, vector<16x4xf32> -> vector<16x8xf32>
    %51 = vector.broadcast %0 : vector<1x8xf32> to vector<16x8xf32>
    %52 = arith.addf %50, %51 : vector<16x8xf32>
    %cst = arith.constant 5.000000e-01 : f32
    %cst_31 = arith.constant 1.090000e+01 : f32
    %53 = vector.broadcast %cst : f32 to vector<16x8xf32>
    %54 = arith.maximumf %53, %52 : vector<16x8xf32>
    %55 = vector.broadcast %cst_31 : f32 to vector<16x8xf32>
    %56 = arith.minimumf %55, %54 : vector<16x8xf32>
    %57 = arith.negf %56 : vector<16x8xf32>
    %58 = math.exp %57 : vector<16x8xf32>
    %cst_32 = arith.constant 1.000000e+00 : f32
    %59 = vector.broadcast %cst_32 : f32 to vector<16x8xf32>
    %60 = arith.addf %59, %58 : vector<16x8xf32>
    %61 = arith.divf %59, %60 : vector<16x8xf32>
    %62 = vector.extract_strided_slice %61 {offsets = [0, 0], sizes = [16, 1], strides = [1, 1]} : vector<16x8xf32> to vector<16x1xf32>
    %63 = vector.broadcast %62 : vector<16x1xf32> to vector<16x28xf32>
    %64 = vector.broadcast %5 : vector<1x28xf32> to vector<16x28xf32>
    %65 = arith.mulf %63, %64 : vector<16x28xf32>
    %66 = vector.broadcast %4 : vector<1x28xf32> to vector<16x28xf32>
    %67 = arith.addf %66, %65 : vector<16x28xf32>
    %68 = vector.extract_strided_slice %61 {offsets = [0, 4], sizes = [16, 1], strides = [1, 1]} : vector<16x8xf32> to vector<16x1xf32>
    %69 = vector.broadcast %68 : vector<16x1xf32> to vector<16x28xf32>
    %70 = vector.broadcast %6 : vector<1x28xf32> to vector<16x28xf32>
    %71 = arith.mulf %69, %70 : vector<16x28xf32>
    %72 = arith.addf %67, %71 : vector<16x28xf32>
    %73 = vector.extract_strided_slice %72 {offsets = [0, 0], sizes = [8, 28], strides = [1, 1]} : vector<16x28xf32> to vector<8x28xf32>
    %c0_33 = arith.constant 0 : index
    %c0_34 = arith.constant 0 : index
    %74 = vector.load %arg2[%c0_33, %c0_34] : memref<64x28xf32, #tpu.memory_space<vmem>>, vector<8x28xf32>
    tpu.vector_store %arg2[%c0_33, %c0_34], %73 {strides = array<i32>} : memref<64x28xf32, #tpu.memory_space<vmem>>, vector<8x28xf32>,
    %75 = vector.extract_strided_slice %72 {offsets = [8, 0], sizes = [8, 28], strides = [1, 1]} : vector<16x28xf32> to vector<8x28xf32>
    %c32 = arith.constant 32 : index
    %c0_35 = arith.constant 0 : index
    %76 = vector.load %arg2[%c32, %c0_35] : memref<64x28xf32, #tpu.memory_space<vmem>>, vector<8x28xf32>
    tpu.vector_store %arg2[%c32, %c0_35], %75 {strides = array<i32>} : memref<64x28xf32, #tpu.memory_space<vmem>>, vector<8x28xf32>,
    %77 = vector.extract_strided_slice %61 {offsets = [0, 1], sizes = [16, 1], strides = [1, 1]} : vector<16x8xf32> to vector<16x1xf32>
    %78 = vector.broadcast %77 : vector<16x1xf32> to vector<16x28xf32>
    %79 = vector.broadcast %5 : vector<1x28xf32> to vector<16x28xf32>
    %80 = arith.mulf %78, %79 : vector<16x28xf32>
    %81 = vector.broadcast %4 : vector<1x28xf32> to vector<16x28xf32>
    %82 = arith.addf %81, %80 : vector<16x28xf32>
    %83 = vector.extract_strided_slice %61 {offsets = [0, 5], sizes = [16, 1], strides = [1, 1]} : vector<16x8xf32> to vector<16x1xf32>
    %84 = vector.broadcast %83 : vector<16x1xf32> to vector<16x28xf32>
    %85 = vector.broadcast %6 : vector<1x28xf32> to vector<16x28xf32>
    %86 = arith.mulf %84, %85 : vector<16x28xf32>
    %87 = arith.addf %82, %86 : vector<16x28xf32>
    %88 = vector.extract_strided_slice %87 {offsets = [0, 0], sizes = [8, 28], strides = [1, 1]} : vector<16x28xf32> to vector<8x28xf32>
    %c8 = arith.constant 8 : index
    %c0_36 = arith.constant 0 : index
    %89 = vector.load %arg2[%c8, %c0_36] : memref<64x28xf32, #tpu.memory_space<vmem>>, vector<8x28xf32>
    tpu.vector_store %arg2[%c8, %c0_36], %88 {strides = array<i32>} : memref<64x28xf32, #tpu.memory_space<vmem>>, vector<8x28xf32>,
    %90 = vector.extract_strided_slice %87 {offsets = [8, 0], sizes = [8, 28], strides = [1, 1]} : vector<16x28xf32> to vector<8x28xf32>
    %c40 = arith.constant 40 : index
    %c0_37 = arith.constant 0 : index
    %91 = vector.load %arg2[%c40, %c0_37] : memref<64x28xf32, #tpu.memory_space<vmem>>, vector<8x28xf32>
    tpu.vector_store %arg2[%c40, %c0_37], %90 {strides = array<i32>} : memref<64x28xf32, #tpu.memory_space<vmem>>, vector<8x28xf32>,
    %92 = vector.extract_strided_slice %61 {offsets = [0, 2], sizes = [16, 1], strides = [1, 1]} : vector<16x8xf32> to vector<16x1xf32>
    %93 = vector.broadcast %92 : vector<16x1xf32> to vector<16x28xf32>
    %94 = vector.broadcast %5 : vector<1x28xf32> to vector<16x28xf32>
    %95 = arith.mulf %93, %94 : vector<16x28xf32>
    %96 = vector.broadcast %4 : vector<1x28xf32> to vector<16x28xf32>
    %97 = arith.addf %96, %95 : vector<16x28xf32>
    %98 = vector.extract_strided_slice %61 {offsets = [0, 6], sizes = [16, 1], strides = [1, 1]} : vector<16x8xf32> to vector<16x1xf32>
    %99 = vector.broadcast %98 : vector<16x1xf32> to vector<16x28xf32>
    %100 = vector.broadcast %6 : vector<1x28xf32> to vector<16x28xf32>
    %101 = arith.mulf %99, %100 : vector<16x28xf32>
    %102 = arith.addf %97, %101 : vector<16x28xf32>
    %103 = vector.extract_strided_slice %102 {offsets = [0, 0], sizes = [8, 28], strides = [1, 1]} : vector<16x28xf32> to vector<8x28xf32>
    %c16 = arith.constant 16 : index
    %c0_38 = arith.constant 0 : index
    %104 = vector.load %arg2[%c16, %c0_38] : memref<64x28xf32, #tpu.memory_space<vmem>>, vector<8x28xf32>
    tpu.vector_store %arg2[%c16, %c0_38], %103 {strides = array<i32>} : memref<64x28xf32, #tpu.memory_space<vmem>>, vector<8x28xf32>,
    %105 = vector.extract_strided_slice %102 {offsets = [8, 0], sizes = [8, 28], strides = [1, 1]} : vector<16x28xf32> to vector<8x28xf32>
    %c48 = arith.constant 48 : index
    %c0_39 = arith.constant 0 : index
    %106 = vector.load %arg2[%c48, %c0_39] : memref<64x28xf32, #tpu.memory_space<vmem>>, vector<8x28xf32>
    tpu.vector_store %arg2[%c48, %c0_39], %105 {strides = array<i32>} : memref<64x28xf32, #tpu.memory_space<vmem>>, vector<8x28xf32>,
    %107 = vector.extract_strided_slice %61 {offsets = [0, 3], sizes = [16, 1], strides = [1, 1]} : vector<16x8xf32> to vector<16x1xf32>
    %108 = vector.broadcast %107 : vector<16x1xf32> to vector<16x28xf32>
    %109 = vector.broadcast %5 : vector<1x28xf32> to vector<16x28xf32>
    %110 = arith.mulf %108, %109 : vector<16x28xf32>
    %111 = vector.broadcast %4 : vector<1x28xf32> to vector<16x28xf32>
    %112 = arith.addf %111, %110 : vector<16x28xf32>
    %113 = vector.extract_strided_slice %61 {offsets = [0, 7], sizes = [16, 1], strides = [1, 1]} : vector<16x8xf32> to vector<16x1xf32>
    %114 = vector.broadcast %113 : vector<16x1xf32> to vector<16x28xf32>
    %115 = vector.broadcast %6 : vector<1x28xf32> to vector<16x28xf32>
    %116 = arith.mulf %114, %115 : vector<16x28xf32>
    %117 = arith.addf %112, %116 : vector<16x28xf32>
    %118 = vector.extract_strided_slice %117 {offsets = [0, 0], sizes = [8, 28], strides = [1, 1]} : vector<16x28xf32> to vector<8x28xf32>
    %c24 = arith.constant 24 : index
    %c0_40 = arith.constant 0 : index
    %119 = vector.load %arg2[%c24, %c0_40] : memref<64x28xf32, #tpu.memory_space<vmem>>, vector<8x28xf32>
    tpu.vector_store %arg2[%c24, %c0_40], %118 {strides = array<i32>} : memref<64x28xf32, #tpu.memory_space<vmem>>, vector<8x28xf32>,
    %120 = vector.extract_strided_slice %117 {offsets = [8, 0], sizes = [8, 28], strides = [1, 1]} : vector<16x28xf32> to vector<8x28xf32>
    %c56 = arith.constant 56 : index
    %c0_41 = arith.constant 0 : index
    %121 = vector.load %arg2[%c56, %c0_41] : memref<64x28xf32, #tpu.memory_space<vmem>>, vector<8x28xf32>
    tpu.vector_store %arg2[%c56, %c0_41], %120 {strides = array<i32>} : memref<64x28xf32, #tpu.memory_space<vmem>>, vector<8x28xf32>,
    return
  }
}

</mosaic_0001>

<llo_original>
// kernel: forward.1
$region0: #{forward.1}
  #allocation0 [shape = 'u32[]', space=smem, size = 0x4, offset = 0x4, fixed_abs, tag = 'smem constant byte address 0x4 - core index']
  #allocation1 [shape = 'u32[72,128]{1,0:T(1,128)}', space=vmem, size = 0x9000, scoped, tag = 'internal scratch']
  %s0 = inlined_call_operand.vmem [shape: f32[2,3,10,4], index: 0, kind: input, shape index: {}]
  %s1 = inlined_call_operand.vmem [shape: f32[8,128], index: 1, kind: input, shape index: {}]
  %s2 = inlined_call_operand.hbm [shape: f32[64,28], index: 2, kind: output, shape index: {}]
  %s3 = sld [smem:[#allocation0]]
  $region18: #{forward.1} parent=0
    _
  %s5 = ssub.s32 1, %s3
  %s6 = scalar_select 0, %s5, %s3
  $region1: #{forward.1} parent=0
    #allocation2 [shape = 'u8[32768]{0}', space=vmem, size = 0x8000, scoped, tag = 'output window, operand 0, single buffered']
    #allocation3 [shape = 's32[1]{0}', space=sflag, size = 0x4, scoped, tag = 'scoped memory for forward.1']
    %7 = vsyncpa [#allocation3], 0
    // Predicated region
    $region2: #{forward.1} parent=1 // pred_check
      _
    $region3: #{forward.1} parent=1 // pred_check_branch
      %9 = sbr.rel (0) target = $region5
    $region4: #{forward.1} parent=1 // pred_region
      _
    $region5: #{forward.1} parent=1 // pred_fallthru
      _
    // Predicated region
    $region6: #{forward.1} parent=1 // pred_check
      _
    $region7: #{forward.1} parent=1 // pred_check_branch
      %11 = sbr.rel (0) target = $region9
    $region8: #{forward.1} parent=1 // pred_region
      _
    $region9: #{forward.1} parent=1 // pred_fallthru
      _
    %v12 = vld [vmem:[%s1] sm:$0x1]
    %v13 = vld [vmem:[%s1 + $0x1] sm:$0x1]
    %v14 = vld [vmem:[%s1 + $0x2] sm:$0x1]
    %v15 = vld [vmem:[%s1 + $0x3] sm:$0x1]
    %v16 = vld [vmem:[%s1 + $0x4] sm:$0x1]
    %v17 = vld [vmem:[%s1 + $0x5] sm:$0x1]
    %v18 = vld [vmem:[%s1 + $0x6] sm:$0x1]
    %v19 = vld [vmem:[%s0 + $0x1] sm:$0xff]
    %s20 = scalar_lea.vmem %s0, 48
    %v21 = vld [vmem:[%s20 + $0x1] sm:$0xff]
    %s22 = scalar_lea.vmem %s0, 16
    %v23 = vld [vmem:[%s22 + $0x1] sm:$0xff]
    %s24 = scalar_lea.vmem %s0, 64
    %v25 = vld [vmem:[%s24 + $0x1] sm:$0xff]
    %s26 = scalar_lea.vmem %s0, 32
    %v27 = vld [vmem:[%s26 + $0x1] sm:$0xff]
    %s28 = scalar_lea.vmem %s0, 80
    %v29 = vld [vmem:[%s28 + $0x1] sm:$0xff]
    %31 = vset.pattern.permute.xlu0 1
    %32 = vperm.xlu0 %31, %v19
    %v33 = vpop.permute.xlu0 %32
    %36 = vset.pattern.permute.xlu0 1
    %37 = vperm.xlu0 %36, %v21
    %v38 = vpop.permute.xlu0 %37
    %v40 = vperm.slane %v13, 0
    %v41 = vmul.f32 %v33, %v40
    %v42 = vmul.f32 %v38, %v40
    %44 = vset.pattern.permute.xlu0 1
    %45 = vperm.xlu0 %44, %v23
    %v46 = vpop.permute.xlu0 %45
    %49 = vset.pattern.permute.xlu0 1
    %50 = vperm.xlu0 %49, %v25
    %v51 = vpop.permute.xlu0 %50
    %v53 = vperm.slane %v14, 0
    %v54 = vmul.f32 %v46, %v53
    %v55 = vmul.f32 %v51, %v53
    %v56 = vadd.f32 %v41, %v54
    %v57 = vadd.f32 %v42, %v55
    %59 = vset.pattern.permute.xlu0 1
    %60 = vperm.xlu0 %59, %v27
    %v61 = vpop.permute.xlu0 %60
    %64 = vset.pattern.permute.xlu0 1
    %65 = vperm.xlu0 %64, %v29
    %v66 = vpop.permute.xlu0 %65
    %v68 = vperm.slane %v15, 0
    %v69 = vmul.f32 %v61, %v68
    %v70 = vmul.f32 %v66, %v68
    %v71 = vadd.f32 %v56, %v69
    %v72 = vadd.f32 %v57, %v70
    %73 = vset.pattern.permute.xlu0 2
    %74 = vperm.xlu0 %73, %v19
    %v75 = vpop.permute.xlu0 %74
    %77 = vset.pattern.permute.xlu0 2
    %78 = vperm.xlu0 %77, %v21
    %v79 = vpop.permute.xlu0 %78
    %v81 = vmul.f32 %v75, %v40
    %v82 = vmul.f32 %v79, %v40
    %83 = vset.pattern.permute.xlu0 2
    %84 = vperm.xlu0 %83, %v23
    %v85 = vpop.permute.xlu0 %84
    %87 = vset.pattern.permute.xlu0 2
    %88 = vperm.xlu0 %87, %v25
    %v89 = vpop.permute.xlu0 %88
    %v91 = vmul.f32 %v85, %v53
    %v92 = vmul.f32 %v89, %v53
    %v93 = vadd.f32 %v81, %v91
    %v94 = vadd.f32 %v82, %v92
    %95 = vset.pattern.permute.xlu0 2
    %96 = vperm.xlu0 %95, %v27
    %v97 = vpop.permute.xlu0 %96
    %99 = vset.pattern.permute.xlu0 2
    %100 = vperm.xlu0 %99, %v29
    %v101 = vpop.permute.xlu0 %100
    %v103 = vmul.f32 %v97, %v68
    %v104 = vmul.f32 %v101, %v68
    %v105 = vadd.f32 %v93, %v103
    %v106 = vadd.f32 %v94, %v104
    %109 = vrot.lane.b32.xlu0 %v105, 4
    %v110 = vpop.permute.xlu0 %109
    %111 = vrot.lane.b32.xlu0 %v106, 4
    %v112 = vpop.permute.xlu0 %111
    %vm115 = vcmask 31744
    %v116 = vsel %vm115, %v71, %v110
    %v117 = vsel %vm115, %v72, %v112
    %v118 = vperm.slane %v12, 0
    %v119 = vadd.f32 %v116, %v118
    %v120 = vadd.f32 %v117, %v118
    %v121 = vmax.f32 %v119, 0.5
    %v122 = vmax.f32 %v120, 0.5
    %v123 = vmin.f32 %v121, 10.9
    %v124 = vmin.f32 %v122, 10.9
    %v125 = vxor.u32 %v123, 2147483648
    %v126 = vxor.u32 %v124, 2147483648
    %v127 = vmul.f32 %v125, 1.442695
    %v128 = vpow.pop %v127
    %v129 = vmul.f32 %v126, 1.442695
    %v130 = vpow.pop %v129
    %v131 = vadd.f32 %v128, 1.0
    %v132 = vadd.f32 %v130, 1.0
    %v133 = vrcp.pop %v131
    %v134 = vmul.f32 %v131, %v133
    %v135 = vsub.f32 1.0, %v134
    %v136 = vmul.f32 %v133, %v135
    %v137 = vadd.f32 %v133, %v136
    %vm138 = vweird.f32 %v131
    %vm139 = vweird.f32 %v133
    %vm140 = vmor %vm138, %vm139
    %v141 = vsel %vm140, %v133, %v137
    %v142 = vand.u32 2147483647, %v131
    %vm143 = vcmp.eq.f32.partialorder %v142, 8.507059e+37
    %v144 = vand.u32 %v131, 2147483648
    %v145 = vor.u32 1.1754944e-38, %v144
    %v146 = vsel %vm143, %v145, %v141
    %v147 = vmul.f32 1.0, %v146
    %v148 = vrcp.pop %v132
    %v149 = vmul.f32 %v132, %v148
    %v150 = vsub.f32 1.0, %v149
    %v151 = vmul.f32 %v148, %v150
    %v152 = vadd.f32 %v148, %v151
    %vm153 = vweird.f32 %v132
    %vm154 = vweird.f32 %v148
    %vm155 = vmor %vm153, %vm154
    %v156 = vsel %vm155, %v148, %v152
    %v157 = vand.u32 2147483647, %v132
    %vm158 = vcmp.eq.f32.partialorder %v157, 8.507059e+37
    %v159 = vand.u32 %v132, 2147483648
    %v160 = vor.u32 1.1754944e-38, %v159
    %v161 = vsel %vm158, %v160, %v156
    %v162 = vmul.f32 1.0, %v161
    %164 = vset.pattern.permute.xlu0 0
    %165 = vperm.xlu0 %164, %v147
    %v166 = vpop.permute.xlu0 %165
    %169 = vset.pattern.permute.xlu0 0
    %170 = vperm.xlu0 %169, %v162
    %v171 = vpop.permute.xlu0 %170
    %v173 = vperm.slane %v17, 0
    %v174 = vmul.f32 %v166, %v173
    %v175 = vmul.f32 %v171, %v173
    %v176 = vperm.slane %v16, 0
    %v177 = vadd.f32 %v176, %v174
    %v178 = vadd.f32 %v176, %v175
    %179 = vset.pattern.permute.xlu0 4
    %180 = vperm.xlu0 %179, %v147
    %v181 = vpop.permute.xlu0 %180
    %183 = vset.pattern.permute.xlu0 4
    %184 = vperm.xlu0 %183, %v162
    %v185 = vpop.permute.xlu0 %184
    %v187 = vperm.slane %v18, 0
    %v188 = vmul.f32 %v181, %v187
    %v189 = vmul.f32 %v185, %v187
    %v190 = vadd.f32 %v177, %v188
    %v191 = vadd.f32 %v178, %v189
    %vm192 = vcmask 228352
    %193 = vst.msk [vmem:[#allocation2] sm:$0xff] %vm192, %v190
    %194 = vst.msk [vmem:[#allocation2 + $0x20] sm:$0xff] %vm192, %v191
    %195 = vset.pattern.permute.xlu0 1
    %196 = vperm.xlu0 %195, %v147
    %v197 = vpop.permute.xlu0 %196
    %199 = vset.pattern.permute.xlu0 1
    %200 = vperm.xlu0 %199, %v162
    %v201 = vpop.permute.xlu0 %200
    %v203 = vmul.f32 %v197, %v173
    %v204 = vmul.f32 %v201, %v173
    %v205 = vadd.f32 %v176, %v203
    %v206 = vadd.f32 %v176, %v204
    %207 = vset.pattern.permute.xlu0 5
    %208 = vperm.xlu0 %207, %v147
    %v209 = vpop.permute.xlu0 %208
    %211 = vset.pattern.permute.xlu0 5
    %212 = vperm.xlu0 %211, %v162
    %v213 = vpop.permute.xlu0 %212
    %v215 = vmul.f32 %v209, %v187
    %v216 = vmul.f32 %v213, %v187
    %v217 = vadd.f32 %v205, %v215
    %v218 = vadd.f32 %v206, %v216
    %219 = vst.msk [vmem:[#allocation2 + $0x8] sm:$0xff] %vm192, %v217
    %220 = vst.msk [vmem:[#allocation2 + $0x28] sm:$0xff] %vm192, %v218
    %221 = vset.pattern.permute.xlu0 2
    %222 = vperm.xlu0 %221, %v147
    %v223 = vpop.permute.xlu0 %222
    %225 = vset.pattern.permute.xlu0 2
    %226 = vperm.xlu0 %225, %v162
    %v227 = vpop.permute.xlu0 %226
    %v229 = vmul.f32 %v223, %v173
    %v230 = vmul.f32 %v227, %v173
    %v231 = vadd.f32 %v176, %v229
    %v232 = vadd.f32 %v176, %v230
    %233 = vset.pattern.permute.xlu0 6
    %234 = vperm.xlu0 %233, %v147
    %v235 = vpop.permute.xlu0 %234
    %237 = vset.pattern.permute.xlu0 6
    %238 = vperm.xlu0 %237, %v162
    %v239 = vpop.permute.xlu0 %238
    %v241 = vmul.f32 %v235, %v187
    %v242 = vmul.f32 %v239, %v187
    %v243 = vadd.f32 %v231, %v241
    %v244 = vadd.f32 %v232, %v242
    %245 = vst.msk [vmem:[#allocation2 + $0x10] sm:$0xff] %vm192, %v243
    %246 = vst.msk [vmem:[#allocation2 + $0x30] sm:$0xff] %vm192, %v244
    %247 = vset.pattern.permute.xlu0 3
    %248 = vperm.xlu0 %247, %v147
    %v249 = vpop.permute.xlu0 %248
    %251 = vset.pattern.permute.xlu0 3
    %252 = vperm.xlu0 %251, %v162
    %v253 = vpop.permute.xlu0 %252
    %v255 = vmul.f32 %v249, %v173
    %v256 = vmul.f32 %v253, %v173
    %v257 = vadd.f32 %v176, %v255
    %v258 = vadd.f32 %v176, %v256
    %259 = vset.pattern.permute.xlu0 7
    %260 = vperm.xlu0 %259, %v147
    %v261 = vpop.permute.xlu0 %260
    %263 = vset.pattern.permute.xlu0 7
    %264 = vperm.xlu0 %263, %v162
    %v265 = vpop.permute.xlu0 %264
    %v267 = vmul.f32 %v261, %v187
    %v268 = vmul.f32 %v265, %v187
    %v269 = vadd.f32 %v257, %v267
    %v270 = vadd.f32 %v258, %v268
    %271 = vst.msk [vmem:[#allocation2 + $0x18] sm:$0xff] %vm192, %v269
    %272 = vst.msk [vmem:[#allocation2 + $0x38] sm:$0xff] %vm192, %v270
    // Predicated region
    $region10: #{forward.1} parent=1 // pred_check
      _
    $region11: #{forward.1} parent=1 // pred_check_branch
      %274 = sbr.rel (0) target = $region13
    $region12: #{forward.1} parent=1 // pred_region
      %276 = vsyncadd [#allocation3], 0
      %s277 = sshll.u32 [#allocation2], 4
      %s278 = int_to_ptr.vmem [resolvable:$true] %s277
      %s279 = sshll.u32 %s2, 4
      %s280 = int_to_ptr.hbm [resolvable:$true] %s279
      %285 = dma.vmem_to_hbm [thread:$0]  %s278, 1024, %s280, [#allocation3], 128, 128, 8
    $region13: #{forward.1} parent=1 // pred_fallthru
      _
    // Predicated region
    $region14: #{forward.1} parent=1 // pred_check
      _
    $region15: #{forward.1} parent=1 // pred_check_branch
      %287 = sbr.rel (0) target = $region17
    $region16: #{forward.1} parent=1 // pred_region
      %289 = dma.done [#allocation3], 1024
    $region17: #{forward.1} parent=1 // pred_fallthru
      _
    %290 = vsyncpa [#allocation3], 1

</llo_original>
